<compile_context>
chip_gen: v5e
topology: v5e:2x2
jax: 0.10.0
libtpu: 0.0.40
codegen_flags: <defaults>
</compile_context>

<pallas_src>
import numpy as np

import jax
import jax.numpy as jnp
from jax.experimental import pallas as pl
from jax.experimental.pallas import tpu as pltpu  # noqa: F401  (TPU backend namespace)


def _identity_kernel(x_ref, o_ref):
    # The output HBM buffer is aliased to the input HBM buffer, so the
    # identity requires no data movement: the body is intentionally empty.
    del x_ref, o_ref


def _identity_pallas(x: jax.Array) -> jax.Array:
    """Identity forward matching LLMadapter_test.forward(input) -> input."""
    return pl.pallas_call(
        _identity_kernel,
        out_shape=jax.ShapeDtypeStruct(x.shape, x.dtype),
        in_specs=[pl.BlockSpec(memory_space=pl.ANY)],   # raw HBM ref, no auto-DMA
        out_specs=pl.BlockSpec(memory_space=pl.ANY),    # raw HBM ref, no auto-DMA
        input_output_aliases={0: 0},                    # output IS the input buffer
    )(x)


# Donating variant: output aliases the caller's buffer -> zero HBM traffic.
llm_adapter_test_forward = jax.jit(_identity_pallas, donate_argnums=0)

# Non-donating variant: keeps `x` valid for the caller; XLA inserts exactly one
# HBM copy to satisfy the alias (still the minimum for a preserved input).
llm_adapter_test_forward_preserve = jax.jit(_identity_pallas)


if __name__ == "__main__":
    key = jax.random.PRNGKey(0)
    # Small NCHW-style input consistent with the adapter test: [B, C, H, W]
    x = jax.random.normal(key, (2, 4, 16, 16), dtype=jnp.float32)

    # Snapshot expected values on host before donating x's device buffer.
    x_host = np.asarray(x)

    y = llm_adapter_test_forward(x)   # donates x; y aliases x's HBM buffer
    y = jax.block_until_ready(y)

    # Verify identity semantics exactly against the pre-donation snapshot.
    assert y.shape == x_host.shape and y.dtype == x_host.dtype
    assert np.array_equal(np.asarray(y), x_host)

    # Also exercise the non-donating path with a ragged (non-multiple-of-128)
    # shape to confirm no pad/reshape/slice plumbing is needed.
    z = jax.random.normal(jax.random.PRNGKey(1), (3, 5, 7), dtype=jnp.bfloat16)
    z_out = jax.block_until_ready(llm_adapter_test_forward_preserve(z))
    assert z_out.shape == z.shape and z_out.dtype == z.dtype
    assert bool(jnp.all(z_out == z))

    print("KERNEL_OK")
</pallas_src>

<mosaic_0001>
module attributes {stable_mosaic.version = 11 : i64} {
  func.func @_identity_kernel(%arg0: memref<2x4x16x16xf32, #tpu.memory_space<any>>, %arg1: memref<2x4x16x16xf32, #tpu.memory_space<any>>) attributes {dimension_semantics = [], scalar_prefetch = 0 : i64, scratch_operands = 0 : i64, tpu.core_type = #tpu.core_type<tc>} {
    return
  }
}

</mosaic_0001>

<llo_original>
// kernel: _identity_pallas.1
$region0: #{_identity_pallas.1}
  #allocation0 [shape = 'u32[]', space=smem, size = 0x4, offset = 0x4, fixed_abs, tag = 'smem constant byte address 0x4 - core index']
  #allocation1 [shape = 'u32[72,128]{1,0:T(1,128)}', space=vmem, size = 0x9000, scoped, tag = 'internal scratch']
  %s0 = inlined_call_operand.hbm [shape: f32[2,4,16,16], index: 0, kind: input, shape index: {}, may-alias: {0,1}]
  %s1 = inlined_call_operand.hbm [shape: f32[2,4,16,16], index: 1, kind: output, shape index: {}, may-alias: {0,1}]
  %s2 = sld [smem:[#allocation0]]
  $region2: #{_identity_pallas.1} parent=0
    _
  %s4 = ssub.s32 1, %s2
  %s5 = scalar_select 0, %s4, %s2

</llo_original>
